<compile_context>
chip_gen: v7x
topology: tpu7x:2x2x1
jax: 0.10.0
libtpu: 0.0.40
codegen_flags: <defaults>
</compile_context>

<pallas_src>
import jax
import jax.numpy as jnp
from jax.experimental import pallas as pl
from jax.experimental.pallas import tpu as pltpu


def _round_up(x, m):
    return (x + m - 1) // m * m


def _vmem_capacity_bytes():
    try:
        return int(pltpu.get_tpu_info().vmem_capacity_bytes)
    except Exception:
        return 64 * 1024 * 1024  # conservative (v7x-sized) fallback


def _pick_tm(batch, vmem_budget):
    """Row-tile size: bound row-padding waste to ~10% and keep ~6 live
    (tm, c_pad) f32 temporaries inside roughly a third of the VMEM budget."""
    c_est = max(128, _round_up(batch, 128))
    tm_cap = (vmem_budget // 3) // (24 * c_est)
    tm_cap = max(8, min(512, tm_cap // 8 * 8))
    if batch <= 512:
        return min(max(8, _round_up(batch, 8)), tm_cap)
    for cand in (512, 256, 128, 64, 32, 16, 8):
        if cand <= tm_cap and (_round_up(batch, cand) - batch) * 10 <= batch:
            return cand
    return 8


def _resident_txt_spec(c_pad, d_pad):
    """Resident text block: single-buffer it when the API allows (its block
    index only changes with the pair axis)."""
    index_map = lambda p, i: (p, 0, 0)
    buffered = getattr(pl, "Buffered", None)
    if buffered is not None:
        try:
            return pl.BlockSpec((1, c_pad, d_pad), index_map,
                                pipeline_mode=buffered(1)), 1
        except TypeError:
            pass
    return pl.BlockSpec((1, c_pad, d_pad), index_map), 2


def _make_kernel(*, tm, c_pad, d_pad, n_valid, num_tiles,
                 need_row_mask, need_col_mask, single_exp):
    """Kernel computing one contrastive loss per leading grid index."""
    neg = -1e30                              # Python float -> jaxpr literal
    inv_2n = 1.0 / float(2 * n_valid)        # Python float -> jaxpr literal

    def kernel(scale_ref, img_ref, txt_ref, out_ref, cmax_ref, csum_ref, acc_ref):
        i = pl.program_id(1)  # row-tile index (reduction axis, "arbitrary")

        # --- init accumulators at the start of each pair's sweep -------------
        @pl.when(i == 0)
        def _init():
            cmax_ref[...] = jnp.full((1, c_pad), neg, jnp.float32)
            csum_ref[...] = jnp.zeros((1, c_pad), jnp.float32)
            acc_ref[...] = jnp.zeros((tm, 1), jnp.float32)

        scale = scale_ref[0, 0]              # f32 scalar from SMEM
        img = img_ref[0]                     # (tm, d_pad)   native dtype
        txt = txt_ref[0]                     # (c_pad, d_pad) native dtype (resident)

        # logits tile on the MXU (f32 accumulation); logit_scale applied in f32
        logits = jax.lax.dot_general(
            img, txt, (((1,), (1,)), ((), ())),
            preferred_element_type=jnp.float32) * scale

        # diagonal (correct-class logit) straight from the feature tiles, in f32
        start = pl.multiple_of(i * tm, tm)
        txt_diag = txt_ref.at[0][pl.ds(start, tm), :]
        diag = scale * jnp.sum(
            img.astype(jnp.float32) * txt_diag.astype(jnp.float32),
            axis=1, keepdims=True)                                  # (tm, 1)

        # validity masking, specialized away when B is already aligned
        row_valid = None
        if need_row_mask:
            row_ids = i * tm + jax.lax.broadcasted_iota(jnp.int32, (tm, 1), 0)
            row_valid = row_ids < n_valid                           # (tm, 1)
        if need_row_mask or need_col_mask:
            valid = row_valid
            if need_col_mask:
                col_ids = jax.lax.broadcasted_iota(jnp.int32, (1, c_pad), 1)
                col_valid = col_ids < n_valid                       # (1, c_pad)
                valid = col_valid if valid is None else jnp.logical_and(valid, col_valid)
            masked = jnp.where(valid, logits, neg)
        else:
            masked = logits

        # ---- row (image -> text) cross-entropy pieces ------------------------
        row_max = jnp.max(masked, axis=1, keepdims=True)            # (tm, 1)
        if single_exp:
            e = jnp.exp(masked - row_max)                           # ONE full-tile exp
            row_sum = jnp.sum(e, axis=1, keepdims=True)
        else:
            row_sum = jnp.sum(jnp.exp(masked - row_max), axis=1, keepdims=True)
        row_term = row_max + jnp.log(row_sum) - 2.0 * diag          # lse - 2*diag
        if need_row_mask:
            row_term = jnp.where(row_valid, row_term, 0.0)
        acc_ref[...] += row_term

        # ---- online column (text -> image) logsumexp --------------------------
        tile_cmax = jnp.max(masked, axis=0, keepdims=True)          # (1, c_pad)
        old_cmax = cmax_ref[...]
        new_cmax = jnp.maximum(old_cmax, tile_cmax)
        alpha = jnp.exp(old_cmax - new_cmax)
        if single_exp:
            # rank-1 rescale of the row-normalized exp tile: no second full exp.
            m_tile = jnp.max(row_max)                               # scalar tile max
            col_part = jnp.sum(e * jnp.exp(row_max - m_tile), axis=0, keepdims=True)
            csum_ref[...] = csum_ref[...] * alpha + col_part * jnp.exp(m_tile - new_cmax)
        else:
            csum_ref[...] = csum_ref[...] * alpha + jnp.sum(
                jnp.exp(masked - new_cmax), axis=0, keepdims=True)
        cmax_ref[...] = new_cmax

        # ---- finalize --------------------------------------------------------
        @pl.when(i == num_tiles - 1)
        def _finalize():
            col_lse = cmax_ref[...] + jnp.log(csum_ref[...])
            if need_col_mask:
                # padded columns may hold -inf / NaN from the sentinel; this
                # select shields them from the reduction.
                col_ids = jax.lax.broadcasted_iota(jnp.int32, (1, c_pad), 1)
                col_lse = jnp.where(col_ids < n_valid, col_lse, 0.0)
            loss = (jnp.sum(acc_ref[...]) + jnp.sum(col_lse)) * inv_2n
            out_ref[...] = jnp.zeros(out_ref.shape, jnp.float32) + loss

    return kernel


def da_clip_loss(image_features, text_features,
                 image_degra_features, text_degra_features, logit_scale,
                 *, tm=None, use_bf16=False, pair_core_parallel=False):
    """DaClipLoss.forward (output_dict=False, world_size=1): (clip_loss, degra_loss)."""
    B, D = image_features.shape

    vmem_cap = _vmem_capacity_bytes()
    vmem_budget = int(vmem_cap * 0.8)        # leave compiler-scratch headroom

    if tm is None:
        tm = _pick_tm(B, vmem_budget)
    tm = max(8, _round_up(int(tm), 8))
    r_pad = _round_up(B, tm)                 # image rows, padded to the tile size
    c_pad = max(_round_up(B, 128), r_pad)    # text rows / logit columns, lane-dense
    d_pad = _round_up(D, 128)
    num_tiles = r_pad // tm

    # stack clip / degra pairs -> one fused kernel with a leading pair axis
    img_all = jnp.stack([image_features, image_degra_features])    # (2, B, D)
    txt_all = jnp.stack([text_features, text_degra_features])      # (2, B, D)
    if use_bf16:
        # bf16 MXU matmul (f32 accumulation); the diagonal stays in f32.
        img_all = img_all.astype(jnp.bfloat16)
        txt_all = txt_all.astype(jnp.bfloat16)
    img_all = jnp.pad(img_all, ((0, 0), (0, r_pad - B), (0, d_pad - D)))
    txt_all = jnp.pad(txt_all, ((0, 0), (0, c_pad - B), (0, d_pad - D)))

    scale = jnp.asarray(logit_scale, jnp.float32).reshape(1, 1)

    # The single-exp (rank-1 rescale) path is safe while exp(2*scale) is finite
    # in f32; with a traced or very large logit_scale use the two-exp path.
    try:
        single_exp = float(jax.device_get(jnp.asarray(logit_scale)).reshape(())) <= 40.0
    except Exception:
        single_exp = False

    kernel = _make_kernel(
        tm=tm, c_pad=c_pad, d_pad=d_pad, n_valid=B, num_tiles=num_tiles,
        need_row_mask=(B < r_pad), need_col_mask=(B < c_pad),
        single_exp=single_exp)

    txt_spec, txt_bufs = _resident_txt_spec(c_pad, d_pad)

    isz = jnp.dtype(img_all.dtype).itemsize
    est = (txt_bufs * c_pad * d_pad * isz        # resident text block(s)
           + 2 * tm * d_pad * isz                # double-buffered image row tiles
           + 6 * tm * c_pad * 4                  # logits / mask / exp temporaries
           + 4 * c_pad * 4 + tm * 4              # online col accumulators + row acc
           + 2 * 8 * 128 * 4)                    # output block
    vmem_limit = int(min(max(2 * est, 32 * 1024 * 1024), vmem_budget))

    exps_per_pair = (r_pad * c_pad if single_exp else 2 * r_pad * c_pad)
    cost = pl.CostEstimate(
        flops=int(2 * (2 * r_pad * c_pad * d_pad + 4 * r_pad * d_pad)),
        transcendentals=int(2 * exps_per_pair),
        bytes_accessed=int(2 * ((r_pad + c_pad) * d_pad * isz) + 2 * 8 * 128 * 4),
    )

    pair_sem = "parallel"
    if pair_core_parallel:
        # v7x: actually shard the two independent losses across the 2 TensorCores.
        pair_sem = getattr(pltpu, "CORE_PARALLEL", "parallel")

    out = pl.pallas_call(
        kernel,
        out_shape=jax.ShapeDtypeStruct((2, 8, 128), jnp.float32),
        grid=(2, num_tiles),
        in_specs=[
            pl.BlockSpec(memory_space=pltpu.MemorySpace.SMEM),          # logit_scale
            pl.BlockSpec((1, tm, d_pad), lambda p, i: (p, i, 0)),       # image row tiles
            txt_spec,                                                   # resident text
        ],
        out_specs=pl.BlockSpec((1, 8, 128), lambda p, i: (p, 0, 0)),
        scratch_shapes=[
            pltpu.VMEM((1, c_pad), jnp.float32),   # running column max
            pltpu.VMEM((1, c_pad), jnp.float32),   # running column sum-exp
            pltpu.VMEM((tm, 1), jnp.float32),      # row-loss (-2*diag) accumulator
        ],
        compiler_params=pltpu.CompilerParams(
            dimension_semantics=(pair_sem, "arbitrary"),
            vmem_limit_bytes=vmem_limit,
        ),
        cost_estimate=cost,
    )(scale, img_all, txt_all)

    losses = out[:, 0, 0]
    return losses[0], losses[1]


def _reference_loss(img, txt, scale):
    img = img.astype(jnp.float32)
    txt = txt.astype(jnp.float32)
    logits = scale * jnp.dot(img, txt.T, precision=jax.lax.Precision.HIGHEST)
    labels = jnp.arange(logits.shape[0])

    def ce(l):
        return jnp.mean(jax.nn.logsumexp(l, axis=1) - l[labels, labels])

    return (ce(logits) + ce(logits.T)) / 2.0


if __name__ == "__main__":
    key = jax.random.PRNGKey(0)
    ks = jax.random.split(key, 8)

    def unit_norm(x):
        return x / jnp.linalg.norm(x, axis=-1, keepdims=True)

    # case 1: small batch, default CLIP logit_scale (~14.29) -> single-exp path.
    B, D = 8, 32
    image_features = unit_norm(jax.random.normal(ks[0], (B, D), jnp.float32))
    text_features = unit_norm(jax.random.normal(ks[1], (B, D), jnp.float32))
    image_degra_features = unit_norm(jax.random.normal(ks[2], (B, D), jnp.float32))
    text_degra_features = unit_norm(jax.random.normal(ks[3], (B, D), jnp.float32))
    logit_scale = jnp.exp(jnp.log(jnp.float32(1.0 / 0.07)))

    clip_loss, degra_loss = da_clip_loss(
        image_features, text_features,
        image_degra_features, text_degra_features, logit_scale)
    jax.block_until_ready((clip_loss, degra_loss))
    ref_clip = _reference_loss(image_features, text_features, logit_scale)
    ref_degra = _reference_loss(image_degra_features, text_degra_features, logit_scale)
    assert jnp.allclose(clip_loss, ref_clip, rtol=2e-3, atol=1e-2), (clip_loss, ref_clip)
    assert jnp.allclose(degra_loss, ref_degra, rtol=2e-3, atol=1e-2), (degra_loss, ref_degra)

    # case 2: non-multiple batch / feature dims with a large logit scale ->
    # exercises padding masks, the multi-tile online column logsumexp and the
    # two-exp fallback path (scale > 40).
    B2, D2 = 12, 48
    big_scale = jnp.float32(100.0)
    if2 = unit_norm(jax.random.normal(ks[4], (B2, D2), jnp.float32))
    tf2 = unit_norm(jax.random.normal(ks[5], (B2, D2), jnp.float32))
    idf2 = unit_norm(jax.random.normal(ks[6], (B2, D2), jnp.float32))
    tdf2 = unit_norm(jax.random.normal(ks[7], (B2, D2), jnp.float32))
    c2, d2 = da_clip_loss(if2, tf2, idf2, tdf2, big_scale, tm=8)
    jax.block_until_ready((c2, d2))
    assert jnp.allclose(c2, _reference_loss(if2, tf2, big_scale), rtol=2e-3, atol=1e-2), c2
    assert jnp.allclose(d2, _reference_loss(idf2, tdf2, big_scale), rtol=2e-3, atol=1e-2), d2

    # case 3: bf16 feature path (f32 accumulation); reference on bf16-rounded inputs.
    if3 = if2.astype(jnp.bfloat16).astype(jnp.float32)
    tf3 = tf2.astype(jnp.bfloat16).astype(jnp.float32)
    idf3 = idf2.astype(jnp.bfloat16).astype(jnp.float32)
    tdf3 = tdf2.astype(jnp.bfloat16).astype(jnp.float32)
    c3, d3 = da_clip_loss(if2, tf2, idf2, tdf2, logit_scale, use_bf16=True)
    jax.block_until_ready((c3, d3))
    assert jnp.allclose(c3, _reference_loss(if3, tf3, logit_scale), rtol=5e-3, atol=1e-2), c3
    assert jnp.allclose(d3, _reference_loss(idf3, tdf3, logit_scale), rtol=5e-3, atol=1e-2), d3

    print("KERNEL_OK")
</pallas_src>

<mosaic_0001>
module attributes {stable_mosaic.version = 11 : i64} {
  func.func @kernel(%arg0: i32, %arg1: i32, %arg2: memref<1x1xf32, #tpu.memory_space<smem>>, %arg3: memref<1x8x128xf32, #tpu.memory_space<vmem>>, %arg4: memref<1x128x128xf32, #tpu.memory_space<vmem>>, %arg5: memref<1x8x128xf32, #tpu.memory_space<vmem>>, %arg6: memref<1x128xf32, #tpu.memory_space<vmem>>, %arg7: memref<1x128xf32, #tpu.memory_space<vmem>>, %arg8: memref<8x1xf32, #tpu.memory_space<vmem>>) attributes {dimension_semantics = [#tpu.dimension_semantics<parallel>, #tpu.dimension_semantics<arbitrary>], iteration_bounds = array<i64: 2, 1>, scalar_prefetch = 0 : i64, scratch_operands = 3 : i64, tpu.core_type = #tpu.core_type<tc>, window_params = [{transform_indices = @transform_0, window_bounds = array<i64: 1, 1>}, {transform_indices = @transform_1, window_bounds = array<i64: 1, 8, 128>}, {pipeline_mode = #tpu.pipeline_mode<synchronous>, transform_indices = @transform_2, window_bounds = array<i64: 1, 128, 128>}, {transform_indices = @transform_3, window_bounds = array<i64: 1, 8, 128>}]} {
    %c0_i32 = arith.constant 0 : i32
    %0 = arith.cmpi eq, %arg1, %c0_i32 : i32
    %1 = arith.extui %0 : i1 to i32
    %c0_i32_0 = arith.constant 0 : i32
    %2 = arith.cmpi ne, %1, %c0_i32_0 : i32
    scf.if %2 {
      %cst_35 = arith.constant -1.000000e+30 : f32
      %73 = vector.broadcast %cst_35 : f32 to vector<1x128xf32>
      %c0_36 = arith.constant 0 : index
      %c0_37 = arith.constant 0 : index
      %74 = vector.load %arg6[%c0_36, %c0_37] : memref<1x128xf32, #tpu.memory_space<vmem>>, vector<1x128xf32>
      tpu.vector_store %arg6[%c0_36, %c0_37], %73 {strides = array<i32>} : memref<1x128xf32, #tpu.memory_space<vmem>>, vector<1x128xf32>,
      %cst_38 = arith.constant 0.000000e+00 : f32
      %75 = vector.broadcast %cst_38 : f32 to vector<1x128xf32>
      %c0_39 = arith.constant 0 : index
      %c0_40 = arith.constant 0 : index
      %76 = vector.load %arg7[%c0_39, %c0_40] : memref<1x128xf32, #tpu.memory_space<vmem>>, vector<1x128xf32>
      tpu.vector_store %arg7[%c0_39, %c0_40], %75 {strides = array<i32>} : memref<1x128xf32, #tpu.memory_space<vmem>>, vector<1x128xf32>,
      %cst_41 = arith.constant 0.000000e+00 : f32
      %77 = vector.broadcast %cst_41 : f32 to vector<8x1xf32>
      %c0_42 = arith.constant 0 : index
      %c0_43 = arith.constant 0 : index
      %78 = vector.load %arg8[%c0_42, %c0_43] : memref<8x1xf32, #tpu.memory_space<vmem>>, vector<8x1xf32>
      tpu.vector_store %arg8[%c0_42, %c0_43], %77 {strides = array<i32>} : memref<8x1xf32, #tpu.memory_space<vmem>>, vector<8x1xf32>,
    } else {
    }
    %c0 = arith.constant 0 : index
    %c0_1 = arith.constant 0 : index
    %3 = memref.load %arg2[%c0, %c0_1] : memref<1x1xf32, #tpu.memory_space<smem>>
    %c0_2 = arith.constant 0 : index
    %c0_3 = arith.constant 0 : index
    %c0_4 = arith.constant 0 : index
    %4 = vector.load %arg3[%c0_2, %c0_3, %c0_4] : memref<1x8x128xf32, #tpu.memory_space<vmem>>, vector<1x8x128xf32>
    %5 = vector.shape_cast %4 : vector<1x8x128xf32> to vector<8x128xf32>
    %c0_5 = arith.constant 0 : index
    %c0_6 = arith.constant 0 : index
    %c0_7 = arith.constant 0 : index
    %6 = vector.load %arg4[%c0_5, %c0_6, %c0_7] : memref<1x128x128xf32, #tpu.memory_space<vmem>>, vector<1x128x128xf32>
    %7 = vector.shape_cast %6 : vector<1x128x128xf32> to vector<128x128xf32>
    %cst = arith.constant dense<0.000000e+00> : vector<8x128xf32>
    %8 = tpu.matmul %5, %7, %cst {dimension_numbers = #tpu.dot_dimension_numbers<[1], [1], [0], [0], [0, 0, 1, 0], [], []>} : vector<8x128xf32>, vector<128x128xf32>, vector<8x128xf32> -> vector<8x128xf32>
    %9 = vector.broadcast %3 : f32 to vector<8x128xf32>
    %10 = arith.mulf %8, %9 : vector<8x128xf32>
    %c8_i32 = arith.constant 8 : i32
    %11 = arith.muli %arg1, %c8_i32 : i32
    %12 = tpu.assume_multiple %11, 8 : i32
    %c0_i32_8 = arith.constant 0 : i32
    %c0_i32_9 = arith.constant 0 : i32
    %c0_i32_10 = arith.constant 0 : i32
    %13 = tpu.memref_slice %arg4[%c0_i32_8, %c0_i32_9, %c0_i32_10] : memref<1x128x128xf32, #tpu.memory_space<vmem>> -> memref<1x128x128xf32, #tpu.memory_space<vmem>>
    %14 = tpu.memref_squeeze %13 : memref<1x128x128xf32, #tpu.memory_space<vmem>> -> memref<128x128xf32, #tpu.memory_space<vmem>>
    %15 = arith.index_cast %12 : i32 to index
    %c0_11 = arith.constant 0 : index
    %16 = vector.load %14[%15, %c0_11] : memref<128x128xf32, #tpu.memory_space<vmem>>, vector<8x128xf32>
    %17 = arith.mulf %5, %16 : vector<8x128xf32>
    %cst_12 = arith.constant dense<0.000000e+00> : vector<8xf32>
    %18 = vector.multi_reduction <add>, %17, %cst_12 [1] : vector<8x128xf32> to vector<8xf32>
    %19 = vector.shape_cast %18 : vector<8xf32> to vector<8x1xf32>
    %20 = vector.broadcast %3 : f32 to vector<8x1xf32>
    %21 = arith.mulf %20, %19 : vector<8x1xf32>
    %22 = tpu.iota {dimensions = array<i32: 1>} : vector<1x128xi32>
    %c8_i32_13 = arith.constant 8 : i32
    %23 = vector.broadcast %c8_i32_13 : i32 to vector<1x128xi32>
    %24 = arith.cmpi slt, %22, %23 : vector<1x128xi32>
    %cst_14 = arith.constant -1.000000e+30 : f32
    %25 = vector.shape_cast %24 : vector<1x128xi1> to vector<1x128xi1>
    %26 = vector.broadcast %25 : vector<1x128xi1> to vector<8x128xi1>
    %27 = vector.broadcast %cst_14 : f32 to vector<8x128xf32>
    %28 = arith.select %26, %10, %27 : vector<8x128xi1>, vector<8x128xf32>
    %cst_15 = arith.constant dense<0xFF800000> : vector<8xf32>
    %29 = vector.multi_reduction <maximumf>, %28, %cst_15 [1] : vector<8x128xf32> to vector<8xf32>
    %30 = vector.shape_cast %29 : vector<8xf32> to vector<8x1xf32>
    %31 = vector.broadcast %30 : vector<8x1xf32> to vector<8x128xf32>
    %32 = arith.subf %28, %31 : vector<8x128xf32>
    %33 = math.exp %32 : vector<8x128xf32>
    %cst_16 = arith.constant dense<0.000000e+00> : vector<8xf32>
    %34 = vector.multi_reduction <add>, %33, %cst_16 [1] : vector<8x128xf32> to vector<8xf32>
    %35 = vector.shape_cast %34 : vector<8xf32> to vector<8x1xf32>
    %36 = math.log %35 : vector<8x1xf32>
    %37 = arith.addf %30, %36 : vector<8x1xf32>
    %cst_17 = arith.constant 2.000000e+00 : f32
    %38 = vector.broadcast %cst_17 : f32 to vector<8x1xf32>
    %39 = arith.mulf %38, %21 : vector<8x1xf32>
    %40 = arith.subf %37, %39 : vector<8x1xf32>
    %c0_18 = arith.constant 0 : index
    %c0_19 = arith.constant 0 : index
    %41 = vector.load %arg8[%c0_18, %c0_19] : memref<8x1xf32, #tpu.memory_space<vmem>>, vector<8x1xf32>
    %42 = arith.addf %41, %40 : vector<8x1xf32>
    %c0_20 = arith.constant 0 : index
    %c0_21 = arith.constant 0 : index
    %43 = vector.load %arg8[%c0_20, %c0_21] : memref<8x1xf32, #tpu.memory_space<vmem>>, vector<8x1xf32>
    tpu.vector_store %arg8[%c0_20, %c0_21], %42 {strides = array<i32>} : memref<8x1xf32, #tpu.memory_space<vmem>>, vector<8x1xf32>,
    %cst_22 = arith.constant dense<0xFF800000> : vector<128xf32>
    %44 = vector.multi_reduction <maximumf>, %28, %cst_22 [0] : vector<8x128xf32> to vector<128xf32>
    %45 = vector.shape_cast %44 : vector<128xf32> to vector<1x128xf32>
    %c0_23 = arith.constant 0 : index
    %c0_24 = arith.constant 0 : index
    %46 = vector.load %arg6[%c0_23, %c0_24] : memref<1x128xf32, #tpu.memory_space<vmem>>, vector<1x128xf32>
    %47 = arith.maximumf %46, %45 : vector<1x128xf32>
    %48 = arith.subf %46, %47 : vector<1x128xf32>
    %49 = math.exp %48 : vector<1x128xf32>
    %50 = vector.shape_cast %30 : vector<8x1xf32> to vector<1x8x1xf32>
    %cst_25 = arith.constant dense<0xFF800000> : vector<1xf32>
    %51 = vector.multi_reduction <maximumf>, %50, %cst_25 [1, 2] : vector<1x8x1xf32> to vector<1xf32>
    %52 = vector.shape_cast %51 : vector<1xf32> to vector<1x1x1xf32>
    %53 = vector.extract %52[0, 0, 0] : f32 from vector<1x1x1xf32>
    %54 = vector.broadcast %53 : f32 to vector<8x1xf32>
    %55 = arith.subf %30, %54 : vector<8x1xf32>
    %56 = math.exp %55 : vector<8x1xf32>
    %57 = vector.broadcast %56 : vector<8x1xf32> to vector<8x128xf32>
    %58 = arith.mulf %33, %57 : vector<8x128xf32>
    %cst_26 = arith.constant dense<0.000000e+00> : vector<128xf32>
    %59 = vector.multi_reduction <add>, %58, %cst_26 [0] : vector<8x128xf32> to vector<128xf32>
    %60 = vector.shape_cast %59 : vector<128xf32> to vector<1x128xf32>
    %c0_27 = arith.constant 0 : index
    %c0_28 = arith.constant 0 : index
    %61 = vector.load %arg7[%c0_27, %c0_28] : memref<1x128xf32, #tpu.memory_space<vmem>>, vector<1x128xf32>
    %62 = arith.mulf %61, %49 : vector<1x128xf32>
    %63 = vector.broadcast %53 : f32 to vector<1x128xf32>
    %64 = arith.subf %63, %47 : vector<1x128xf32>
    %65 = math.exp %64 : vector<1x128xf32>
    %66 = arith.mulf %60, %65 : vector<1x128xf32>
    %67 = arith.addf %62, %66 : vector<1x128xf32>
    %c0_29 = arith.constant 0 : index
    %c0_30 = arith.constant 0 : index
    %68 = vector.load %arg7[%c0_29, %c0_30] : memref<1x128xf32, #tpu.memory_space<vmem>>, vector<1x128xf32>
    tpu.vector_store %arg7[%c0_29, %c0_30], %67 {strides = array<i32>} : memref<1x128xf32, #tpu.memory_space<vmem>>, vector<1x128xf32>,
    %c0_31 = arith.constant 0 : index
    %c0_32 = arith.constant 0 : index
    %69 = vector.load %arg6[%c0_31, %c0_32] : memref<1x128xf32, #tpu.memory_space<vmem>>, vector<1x128xf32>
    tpu.vector_store %arg6[%c0_31, %c0_32], %47 {strides = array<i32>} : memref<1x128xf32, #tpu.memory_space<vmem>>, vector<1x128xf32>,
    %c0_i32_33 = arith.constant 0 : i32
    %70 = arith.cmpi eq, %arg1, %c0_i32_33 : i32
    %71 = arith.extui %70 : i1 to i32
    %c0_i32_34 = arith.constant 0 : i32
    %72 = arith.cmpi ne, %71, %c0_i32_34 : i32
    scf.if %72 {
      %c0_35 = arith.constant 0 : index
      %c0_36 = arith.constant 0 : index
      %73 = vector.load %arg6[%c0_35, %c0_36] : memref<1x128xf32, #tpu.memory_space<vmem>>, vector<1x128xf32>
      %c0_37 = arith.constant 0 : index
      %c0_38 = arith.constant 0 : index
      %74 = vector.load %arg7[%c0_37, %c0_38] : memref<1x128xf32, #tpu.memory_space<vmem>>, vector<1x128xf32>
      %75 = math.log %74 : vector<1x128xf32>
      %76 = arith.addf %73, %75 : vector<1x128xf32>
      %77 = tpu.iota {dimensions = array<i32: 1>} : vector<1x128xi32>
      %c8_i32_39 = arith.constant 8 : i32
      %78 = vector.broadcast %c8_i32_39 : i32 to vector<1x128xi32>
      %79 = arith.cmpi slt, %77, %78 : vector<1x128xi32>
      %cst_40 = arith.constant 0.000000e+00 : f32
      %80 = vector.broadcast %cst_40 : f32 to vector<1x128xf32>
      %81 = arith.select %79, %76, %80 : vector<1x128xi1>, vector<1x128xf32>
      %c0_41 = arith.constant 0 : index
      %c0_42 = arith.constant 0 : index
      %82 = vector.load %arg8[%c0_41, %c0_42] : memref<8x1xf32, #tpu.memory_space<vmem>>, vector<8x1xf32>
      %83 = vector.shape_cast %82 : vector<8x1xf32> to vector<1x8x1xf32>
      %cst_43 = arith.constant dense<0.000000e+00> : vector<1xf32>
      %84 = vector.multi_reduction <add>, %83, %cst_43 [1, 2] : vector<1x8x1xf32> to vector<1xf32>
      %85 = vector.shape_cast %84 : vector<1xf32> to vector<1x1x1xf32>
      %86 = vector.extract %85[0, 0, 0] : f32 from vector<1x1x1xf32>
      %87 = vector.shape_cast %81 : vector<1x128xf32> to vector<1x1x128xf32>
      %cst_44 = arith.constant dense<0.000000e+00> : vector<1xf32>
      %88 = vector.multi_reduction <add>, %87, %cst_44 [1, 2] : vector<1x1x128xf32> to vector<1xf32>
      %89 = vector.shape_cast %88 : vector<1xf32> to vector<1x1x1xf32>
      %90 = vector.extract %89[0, 0, 0] : f32 from vector<1x1x1xf32>
      %91 = arith.addf %86, %90 : f32
      %cst_45 = arith.constant 6.250000e-02 : f32
      %92 = arith.mulf %91, %cst_45 : f32
      %cst_46 = arith.constant 0.000000e+00 : f32
      %93 = vector.broadcast %cst_46 : f32 to vector<1x8x128xf32>
      %94 = vector.broadcast %92 : f32 to vector<1x8x128xf32>
      %95 = arith.addf %93, %94 : vector<1x8x128xf32>
      %c0_47 = arith.constant 0 : index
      %c0_48 = arith.constant 0 : index
      %c0_49 = arith.constant 0 : index
      %96 = vector.load %arg5[%c0_47, %c0_48, %c0_49] : memref<1x8x128xf32, #tpu.memory_space<vmem>>, vector<1x8x128xf32>
      tpu.vector_store %arg5[%c0_47, %c0_48, %c0_49], %95 {strides = array<i32>} : memref<1x8x128xf32, #tpu.memory_space<vmem>>, vector<1x8x128xf32>,
    } else {
    }
    return
  }
  func.func @transform_0(%arg0: i32, %arg1: i32) -> (i32, i32) {
    %c0_i32 = arith.constant 0 : i32
    %c0_i32_0 = arith.constant 0 : i32
    %c0_i32_1 = arith.constant 0 : i32
    return %c0_i32, %c0_i32_0 : i32, i32
  }
  func.func @transform_1(%arg0: i32, %arg1: i32) -> (i32, i32, i32) {
    %c0_i32 = arith.constant 0 : i32
    %c0_i32_0 = arith.constant 0 : i32
    return %arg0, %arg1, %c0_i32 : i32, i32, i32
  }
  func.func @transform_2(%arg0: i32, %arg1: i32) -> (i32, i32, i32) {
    %c0_i32 = arith.constant 0 : i32
    %c0_i32_0 = arith.constant 0 : i32
    %c0_i32_1 = arith.constant 0 : i32
    return %arg0, %c0_i32, %c0_i32_0 : i32, i32, i32
  }
  func.func @transform_3(%arg0: i32, %arg1: i32) -> (i32, i32, i32) {
    %c0_i32 = arith.constant 0 : i32
    %c0_i32_0 = arith.constant 0 : i32
    %c0_i32_1 = arith.constant 0 : i32
    return %arg0, %c0_i32, %c0_i32_0 : i32, i32, i32
  }
}

</mosaic_0001>

<llo_original>
// kernel: tpu_custom_call.1
$region0: #{tpu_custom_call.1}
  #allocation0 [shape = 'u32[]', space=smem, size = 0x4, offset = 0x4, fixed_abs, tag = 'smem constant byte address 0x4 - core index']
  #allocation1 [shape = 'u32[144,128]{1,0:T(1,128)}', space=vmem, size = 0x12000, scoped, tag = 'internal scratch']
  #allocation2 [shape = 'f32[1,128]{1,0:T(1,128)}', space=vmem, size = 0x200, scoped, tag = 'scratch operand']
  #allocation3 [shape = 'f32[1,128]{1,0:T(1,128)}', space=vmem, size = 0x200, scoped, tag = 'scratch operand']
  #allocation4 [shape = 'f32[8,1]{1,0:T(8,128)}', space=vmem, size = 0x1000, scoped, tag = 'scratch operand']
  #allocation5 [shape = 'f32[1,1]{1,0:T(1,128)S(6)}', space=smem, size = 0x200, scoped, tag = 'scoped memory for tpu_custom_call.1']
  %s0 = inlined_call_operand.<no memory space> [shape: f32[1,1], index: 0, kind: input, shape index: {}]
  %s1 = inlined_call_operand.hbm [shape: f32[2,8,128], index: 1, kind: input, shape index: {}]
  %s2 = inlined_call_operand.hbm [shape: f32[2,128,128], index: 2, kind: input, shape index: {}]
  %s3 = inlined_call_operand.hbm [shape: f32[2,8,128], index: 3, kind: output, shape index: {}]
  %s4 = sld [smem:[#allocation0]]
  $region61: #{tpu_custom_call.1} parent=0
    _
  %s6 = ssub.s32 1, %s4
  %s7 = scalar_select 0, %s6, %s4
  %8 = sst [smem:[#allocation5]] %s0
  $region1: #{tpu_custom_call.1} parent=0
    #allocation6 [shape = 'u8[8192]{0}', space=vmem, size = 0x2000, scoped, tag = 'input window, operand 1']
    #allocation7 [shape = 's32[2]{0}', space=sflag, size = 0x8, scoped, tag = 'scoped memory for tpu_custom_call.1']
    #allocation8 [shape = 's32[2]{0}', space=sflag, size = 0x8, scoped, tag = 'scoped memory for tpu_custom_call.1']
    #allocation9 [shape = 'u8[65536]{0}', space=vmem, size = 0x10000, scoped, tag = 'input window, operand 2, single buffered']
    #allocation10 [shape = 's32[1]{0}', space=sflag, size = 0x4, scoped, tag = 'scoped memory for tpu_custom_call.1']
    #allocation11 [shape = 'u8[8192]{0}', space=vmem, size = 0x2000, scoped, tag = 'output window, operand 0']
    %9 = vsyncpa [#allocation7], 0
    %s10 = scalar_lea.sflag [#allocation7], 1
    %11 = vsyncpa %s10, 0
    %12 = vsyncpa [#allocation10], 0
    %13 = vsyncpa [#allocation8], 0
    %s14 = scalar_lea.sflag [#allocation8], 1
    %15 = vsyncpa %s14, 0
    loop: start=0, step=1, limit=4
    $region2: #{tpu_custom_call.1} parent=1 // loop_pre_header
      _
    $region3: #{tpu_custom_call.1} parent=1 // loop_header
      %s17 = sphi 0, %s21
      %p18 = scmp.ge.s32.totalorder %s17, 4
      %s24 = sphi 0, %s36
      %s25 = sphi 0, %s32
      %s26 = sphi 0, %s24
      %s27 = sphi 0, %s25
      %s28 = sphi 0, %s26
      %s29 = sphi 0, %s27
      %s37 = sphi 0, %s37
      %s39 = sphi 0, %s37
      %s40 = sphi 0, %s39
      %s54 = sphi 0, %s40
      %s62 = sphi 0, %s64
      %s65 = sphi 0, %s62
      %s66 = sphi 0, %s65
      %s82 = sphi 0, %s66
      %s88 = sphi 0, %s90
      %s91 = sphi 0, %s88
      %s92 = sphi 0, %s91
      %s108 = sphi 0, %s92
      %s114 = sphi 0, %s116
      %s117 = sphi 0, %s114
      %s118 = sphi 0, %s117
      %s134 = sphi 0, %s118
    $region4: #{tpu_custom_call.1} parent=1 // loop_header_branch
      %20 = sbr.rel (%p18) target = $region8
    $region5: #{tpu_custom_call.1} parent=1 // loop_body
      %s22 = ssub.s32 %s17, 1
      %s23 = ssub.s32 %s17, 2
      %s30 = sadd.s32 1, %s25
      %p31 = scmp.ge.s32.totalorder %s30, 1
      %s32 = scalar_select %p31, 0, %s30
      %s33 = sadd.s32 1, %s24
      %s34 = scalar_select %p31, %s33, %s24
      %p35 = scmp.ge.s32.totalorder %s34, 2
      %s36 = scalar_select %p35, 0, %s34
      %s38 = sadd.s32 %s37, 1
      %p41 = scmp.eq.s32.totalorder %s17, 1
      %p42 = scmp.ne.s32.totalorder %s37, %s39
      %p43 = scmp.eq.s32.totalorder %s17, 0
      %p44 = por %p42, %p43
      %p45 = scmp.ne.s32.totalorder %s37, %s39
      %p46 = scmp.eq.s32.totalorder %s22, 1
      %p47 = por %p45, %p46
      %p48 = scmp.ne.s32.totalorder %s39, %s40
      %p49 = scmp.eq.s32.totalorder %s22, 0
      %p50 = por %p48, %p49
      %p51 = scmp.ne.s32.totalorder %s39, %s40
      %p52 = scmp.eq.s32.totalorder %s23, 1
      %p53 = por %p51, %p52
      %p55 = scmp.ne.s32.totalorder %s40, %s54
      %p56 = scmp.eq.s32.totalorder %s23, 0
      %p57 = por %p55, %p56
      %s58 = ssub.s32 %s24, %s36
      %s59 = ssub.s32 %s25, %s32
      %s60 = sor.u32 %s58, %s59
      %p61 = scmp.eq.s32.totalorder %s60, 0
      %s63 = sadd.s32 %s62, 1
      %s64 = scalar_select %p61, %s62, %s63
      %p67 = pneg %p61
      %p68 = scmp.eq.s32.totalorder %s17, 1
      %p69 = por %p67, %p68
      %p70 = scmp.ne.s32.totalorder %s62, %s65
      %p71 = scmp.eq.s32.totalorder %s17, 0
      %p72 = por %p70, %p71
      %p73 = scmp.ne.s32.totalorder %s62, %s65
      %p74 = scmp.eq.s32.totalorder %s22, 1
      %p75 = por %p73, %p74
      %p76 = scmp.ne.s32.totalorder %s65, %s66
      %p77 = scmp.eq.s32.totalorder %s22, 0
      %p78 = por %p76, %p77
      %p79 = scmp.ne.s32.totalorder %s65, %s66
      %p80 = scmp.eq.s32.totalorder %s23, 1
      %p81 = por %p79, %p80
      %p83 = scmp.ne.s32.totalorder %s66, %s82
      %p84 = scmp.eq.s32.totalorder %s23, 0
      %p85 = por %p83, %p84
      %s86 = ssub.s32 %s24, %s36
      %p87 = scmp.eq.s32.totalorder %s86, 0
      %s89 = sadd.s32 %s88, 1
      %s90 = scalar_select %p87, %s88, %s89
      %p93 = pneg %p87
      %p94 = scmp.eq.s32.totalorder %s17, 1
      %p95 = por %p93, %p94
      %p96 = scmp.ne.s32.totalorder %s88, %s91
      %p97 = scmp.eq.s32.totalorder %s17, 0
      %p98 = por %p96, %p97
      %p99 = scmp.ne.s32.totalorder %s88, %s91
      %p100 = scmp.eq.s32.totalorder %s22, 1
      %p101 = por %p99, %p100
      %p102 = scmp.ne.s32.totalorder %s91, %s92
      %p103 = scmp.eq.s32.totalorder %s22, 0
      %p104 = por %p102, %p103
      %p105 = scmp.ne.s32.totalorder %s91, %s92
      %p106 = scmp.eq.s32.totalorder %s23, 1
      %p107 = por %p105, %p106
      %p109 = scmp.ne.s32.totalorder %s92, %s108
      %p110 = scmp.eq.s32.totalorder %s23, 0
      %p111 = por %p109, %p110
      %s112 = ssub.s32 %s24, %s36
      %p113 = scmp.eq.s32.totalorder %s112, 0
      %s115 = sadd.s32 %s114, 1
      %s116 = scalar_select %p113, %s114, %s115
      %p119 = pneg %p113
      %p120 = scmp.eq.s32.totalorder %s17, 1
      %p121 = por %p119, %p120
      %p122 = scmp.ne.s32.totalorder %s114, %s117
      %p123 = scmp.eq.s32.totalorder %s17, 0
      %p124 = por %p122, %p123
      %p125 = scmp.ne.s32.totalorder %s114, %s117
      %p126 = scmp.eq.s32.totalorder %s22, 1
      %p127 = por %p125, %p126
      %p128 = scmp.ne.s32.totalorder %s117, %s118
      %p129 = scmp.eq.s32.totalorder %s22, 0
      %p130 = por %p128, %p129
      %p131 = scmp.ne.s32.totalorder %s117, %s118
      %p132 = scmp.eq.s32.totalorder %s23, 1
      %p133 = por %p131, %p132
      %p135 = scmp.ne.s32.totalorder %s118, %s134
      %p136 = scmp.eq.s32.totalorder %s23, 0
      %p137 = por %p135, %p136
      %p138 = scmp.le.s32.totalorder 1, %s17
      %p139 = scmp.lt.s32.totalorder %s17, 3
      %p140 = pnand %p138, %p139
      %p141 = pneg %p140
      // Predicated region
      $region9: #{tpu_custom_call.1} parent=5 // pred_check
        _
      $region10: #{tpu_custom_call.1} parent=5 // pred_check_branch
        %143 = sbr.rel (%p140) target = $region12
      $region11: #{tpu_custom_call.1} parent=5 // pred_region
        %s144 = ssub.s32 %s17, 1
        // Predicated region
        $region13: #{tpu_custom_call.1} parent=11 // pred_check
          %p145 = pneg %p50
        $region14: #{tpu_custom_call.1} parent=11 // pred_check_branch
          %147 = sbr.rel (%p145) target = $region16
        $region15: #{tpu_custom_call.1} parent=11 // pred_region
          _
        $region16: #{tpu_custom_call.1} parent=11 // pred_fallthru
          _
        // Predicated region
        $region17: #{tpu_custom_call.1} parent=11 // pred_check
          %p148 = pneg %p104
        $region18: #{tpu_custom_call.1} parent=11 // pred_check_branch
          %150 = sbr.rel (%p148) target = $region20
        $region19: #{tpu_custom_call.1} parent=11 // pred_region
          %s152 = ssub.s32 2048, 2048
          %153 = vsyncadd [#allocation10], %s152
          %s154 = smul.addr %s26, 16
          %s155 = smul.addr %s154, 128
          %s156 = scalar_lea.hbm %s2, %s155
          %s157 = sshll.u32 [#allocation9], 4
          %s158 = int_to_ptr.vmem [resolvable:$true] %s157
          %163 = dma.hbm_to_vmem [thread:$0]  %s156, 2048, %s158, [#allocation10], 128, 128, 8
        $region20: #{tpu_custom_call.1} parent=11 // pred_fallthru
          _
      $region12: #{tpu_custom_call.1} parent=5 // pred_fallthru
        _
      %p164 = scmp.lt.s32.totalorder %s17, 2
      // Predicated region
      $region21: #{tpu_custom_call.1} parent=5 // pred_check
        %p165 = pneg %p164
      $region22: #{tpu_custom_call.1} parent=5 // pred_check_branch
        %167 = sbr.rel (%p165) target = $region24
      $region23: #{tpu_custom_call.1} parent=5 // pred_region
        // Predicated region
        $region25: #{tpu_custom_call.1} parent=23 // pred_check
          %p168 = pneg %p72
        $region26: #{tpu_custom_call.1} parent=23 // pred_check_branch
          %170 = sbr.rel (%p168) target = $region28
        $region27: #{tpu_custom_call.1} parent=23 // pred_region
          %s171 = sand.u32 %s62, 1
          %s172 = scalar_lea.sflag [#allocation7], %s171
          %s173 = sand.u32 %s62, 1
          %s174 = smul.addr %s173, 8
          %s175 = scalar_lea.vmem [#allocation6], %s174
          %s177 = ssub.s32 128, 128
          %178 = vsyncadd %s172, %s177
          %s179 = sadd.s32 %s25, %s24
          %s180 = smul.addr %s179, 128
          %s181 = scalar_lea.hbm %s1, %s180
          %s183 = sshll.u32 %s175, 4
          %s184 = int_to_ptr.vmem [resolvable:$true] %s183
          %186 = dma.hbm_to_vmem [thread:$0]  %s181, 128, %s184, %s172
        $region28: #{tpu_custom_call.1} parent=23 // pred_fallthru
          _
      $region24: #{tpu_custom_call.1} parent=5 // pred_fallthru
        _
      %p187 = scmp.le.s32.totalorder 1, %s17
      %p188 = scmp.lt.s32.totalorder %s17, 3
      %p189 = pnand %p187, %p188
      %p190 = pneg %p189
      // Predicated region
      $region29: #{tpu_custom_call.1} parent=5 // pred_check
        _
      $region30: #{tpu_custom_call.1} parent=5 // pred_check_branch
        %192 = sbr.rel (%p189) target = $region32
      $region31: #{tpu_custom_call.1} parent=5 // pred_region
        %s193 = ssub.s32 %s17, 1
        %s194 = sand.u32 %s65, 1
        %s195 = scalar_lea.sflag [#allocation7], %s194
        %s196 = sand.u32 %s65, 1
        %s197 = smul.addr %s196, 8
        %s198 = scalar_lea.vmem [#allocation6], %s197
        // Predicated region
        $region33: #{tpu_custom_call.1} parent=31 // pred_check
          %p199 = pneg %p78
        $region34: #{tpu_custom_call.1} parent=31 // pred_check_branch
          %201 = sbr.rel (%p199) target = $region36
        $region35: #{tpu_custom_call.1} parent=31 // pred_region
          %202 = dma.done %s195, 128
        $region36: #{tpu_custom_call.1} parent=31 // pred_fallthru
          _
        // Predicated region
        $region37: #{tpu_custom_call.1} parent=31 // pred_check
          %p203 = pneg %p104
        $region38: #{tpu_custom_call.1} parent=31 // pred_check_branch
          %205 = sbr.rel (%p203) target = $region40
        $region39: #{tpu_custom_call.1} parent=31 // pred_region
          %206 = dma.done [#allocation10], 2048
        $region40: #{tpu_custom_call.1} parent=31 // pred_fallthru
          _
        %p207 = pneg %p50
        %p208 = pneg %p47
        %s209 = sand.u32 %s65, 1
        %s210 = scalar_lea.sflag [#allocation7], %s209
        %s211 = sand.u32 %s65, 1
        %s212 = smul.addr %s211, 8
        %s213 = scalar_lea.vmem [#allocation6], %s212
        %p214 = pneg %p78
        %p215 = pneg %p75
        %p216 = pneg %p104
        %p217 = pneg %p101
        %p218 = pneg %p130
        %p219 = pneg %p127
        %s220 = sand.u32 %s117, 1
        %s221 = scalar_lea.sflag [#allocation8], %s220
        %s222 = sand.u32 %s117, 1
        %s223 = smul.addr %s222, 8
        %s224 = scalar_lea.vmem [#allocation11], %s223
        %p225 = scmp.eq.s32.totalorder %s27, 0
        // Predicated region
        $region41: #{tpu_custom_call.1} parent=31 // pred_check
          %p226 = pneg %p225
        $region42: #{tpu_custom_call.1} parent=31 // pred_check_branch
          %228 = sbr.rel (%p226) target = $region44
        $region43: #{tpu_custom_call.1} parent=31 // pred_region
          %229 = vst [vmem:[#allocation2] sm:$0x1] -1e+30
          %230 = vst [vmem:[#allocation3] sm:$0x1] 0.0
          %vm231 = vcmask 7168
          %232 = vst.msk [vmem:[#allocation4] sm:$0xff] %vm231, 0.0
        $region44: #{tpu_custom_call.1} parent=31 // pred_fallthru
          _
        %s233 = sld [smem:[#allocation5]]
        %v234 = vld [vmem:[%s198] sm:$0xff]
        %v235 = vld [vmem:[#allocation9] sm:$0xff]
        %v236 = vld [vmem:[#allocation9 + $0x8] sm:$0xff]
        %v237 = vld [vmem:[#allocation9 + $0x10] sm:$0xff]
        %v238 = vld [vmem:[#allocation9 + $0x18] sm:$0xff]
        %v239 = vld [vmem:[#allocation9 + $0x20] sm:$0xff]
        %v240 = vld [vmem:[#allocation9 + $0x28] sm:$0xff]
        %v241 = vld [vmem:[#allocation9 + $0x30] sm:$0xff]
        %v242 = vld [vmem:[#allocation9 + $0x38] sm:$0xff]
        %v243 = vld [vmem:[#allocation9 + $0x40] sm:$0xff]
        %v244 = vld [vmem:[#allocation9 + $0x48] sm:$0xff]
        %v245 = vld [vmem:[#allocation9 + $0x50] sm:$0xff]
        %v246 = vld [vmem:[#allocation9 + $0x58] sm:$0xff]
        %v247 = vld [vmem:[#allocation9 + $0x60] sm:$0xff]
        %v248 = vld [vmem:[#allocation9 + $0x68] sm:$0xff]
        %v249 = vld [vmem:[#allocation9 + $0x70] sm:$0xff]
        %v250 = vld [vmem:[#allocation9 + $0x78] sm:$0xff]
        %251 = vmatprep.subr.mxu0 0.0
        %252 = vmatpush1.xpose.msra.mxu0 %v235
        %253 = vmatprep.subr.mxu0 0.0
        %254 = vmatpush1.xpose.msra.mxu0 %v236
        %255 = vmatprep.subr.mxu0 0.0
        %256 = vmatpush1.xpose.msra.mxu0 %v237
        %257 = vmatprep.subr.mxu0 0.0
        %258 = vmatpush1.xpose.msra.mxu0 %v238
        %259 = vmatprep.subr.mxu0 0.0
        %260 = vmatpush1.xpose.msra.mxu0 %v239
        %261 = vmatprep.subr.mxu0 0.0
        %262 = vmatpush1.xpose.msra.mxu0 %v240
        %263 = vmatprep.subr.mxu0 0.0
        %264 = vmatpush1.xpose.msra.mxu0 %v241
        %265 = vmatprep.subr.mxu0 0.0
        %266 = vmatpush1.xpose.msra.mxu0 %v242
        %267 = vmatprep.subr.mxu0 0.0
        %268 = vmatpush1.xpose.msra.mxu0 %v243
        %269 = vmatprep.subr.mxu0 0.0
        %270 = vmatpush1.xpose.msra.mxu0 %v244
        %271 = vmatprep.subr.mxu0 0.0
        %272 = vmatpush1.xpose.msra.mxu0 %v245
        %273 = vmatprep.subr.mxu0 0.0
        %274 = vmatpush1.xpose.msra.mxu0 %v246
        %275 = vmatprep.subr.mxu0 0.0
        %276 = vmatpush1.xpose.msra.mxu0 %v247
        %277 = vmatprep.subr.mxu0 0.0
        %278 = vmatpush1.xpose.msra.mxu0 %v248
        %279 = vmatprep.subr.mxu0 0.0
        %280 = vmatpush1.xpose.msra.mxu0 %v249
        %281 = vmatprep.subr.mxu0 0.0
        %282 = vmatpush1.xpose.msra.mxu0 %v250
        %283 = vmatprep.subr.mxu0 0.0
        %284 = vmatpush1.xpose.msra.mxu0 0.0
        %285 = vmatprep.subr.mxu0 0.0
        %286 = vmatpush1.xpose.msra.mxu0 0.0
        %287 = vmatprep.subr.mxu0 0.0
        %288 = vmatpush1.xpose.msra.mxu0 0.0
        %289 = vmatprep.subr.mxu0 0.0
        %290 = vmatpush1.xpose.msra.mxu0 0.0
        %291 = vmatprep.subr.mxu0 0.0
        %292 = vmatpush1.xpose.msra.mxu0 0.0
        %293 = vmatprep.subr.mxu0 0.0
        %294 = vmatpush1.xpose.msra.mxu0 0.0
        %295 = vmatprep.subr.mxu0 0.0
        %296 = vmatpush1.xpose.msra.mxu0 0.0
        %297 = vmatprep.subr.mxu0 0.0
        %298 = vmatpush1.xpose.msra.mxu0 0.0
        %299 = vmatprep.subr.mxu0 0.0
        %300 = vmatpush1.xpose.msra.mxu0 0.0
        %301 = vmatprep.subr.mxu0 0.0
        %302 = vmatpush1.xpose.msra.mxu0 0.0
        %303 = vmatprep.subr.mxu0 0.0
        %304 = vmatpush1.xpose.msra.mxu0 0.0
        %305 = vmatprep.subr.mxu0 0.0
        %306 = vmatpush1.xpose.msra.mxu0 0.0
        %307 = vmatprep.subr.mxu0 0.0
        %308 = vmatpush1.xpose.msra.mxu0 0.0
        %309 = vmatprep.subr.mxu0 0.0
        %310 = vmatpush1.xpose.msra.mxu0 0.0
        %311 = vmatprep.subr.mxu0 0.0
        %312 = vmatpush1.xpose.msra.mxu0 0.0
        %313 = vmatprep.subr.mxu0 0.0
        %314 = vmatpush1.xpose.msra.mxu0 0.0
        %315 = vmatprep.mubr.f32.mxu0 0.0
        %316 = vmatmul.mubr.f32.gmra.mrb[0].mxu0 %v234
        %v317 = vpop.f32.mrb[0].mxu0
        %v318 = vadd.f32 0.0, %v317
        %v319 = vpop.f32.mrb[0].mxu0
        %320 = vdwg.mxu0
        %v321 = vstv %s233
        %v322 = vmul.f32 %v318, %v321
        %s323 = smul.u32 %s27, 8
        %s324 = scalar_lea.vmem [#allocation9], %s323
        %v325 = vld [vmem:[%s324] sm:$0xff]
        %v326 = vmul.f32 %v234, %v325
        %327 = vadd.xlane.f32.xlu0 %v326
        %v328 = vpop.xlane.xlu0 %327
        %v329 = vmul.f32 %v321, %v328
        %v330 = vlaneseq
        %v331 = vand.u32 %v330, 127
        %vm332 = vcmp.lt.s32.totalorder %v331, 8
        %v333 = vsel %vm332, 1, 0
        %vm334 = vcmp.eq.s32.totalorder %v333, 1
        %v335 = vsel %vm334, %v322, -1e+30
        %336 = vmax.xlane.f32.xlu0 %v335
        %v337 = vpop.xlane.xlu0 %336
        %v338 = vsub.f32 %v335, %v337
        %v339 = vmul.f32 %v338, 1.442695
        %v340 = vpow.pop %v339
        %341 = vadd.xlane.f32.xlu0 %v340
        %v342 = vpop.xlane.xlu0 %341
        %v343 = vlog2.pop %v342
        %v344 = vmul.f32 %v343, 0.6931472
        %v345 = vadd.f32 %v337, %v344
        %v346 = vmul.f32 %v329, 2.0
        %v347 = vsub.f32 %v345, %v346
        %v348 = vld [vmem:[#allocation4] sm:$0xff]
        %v349 = vadd.f32 %v348, %v347
        %vm350 = vcmask 7168
        %351 = vst.msk [vmem:[#allocation4] sm:$0xff] %vm350, %v349
        %v352 = vrot.slane %v335, 4
        %v353 = vmax.f32 %v335, %v352
        %v354 = vrot.slane %v353, 2
        %v355 = vmax.f32 %v353, %v354
        %v356 = vrot.slane %v355, 1
        %v357 = vmax.f32 %v355, %v356
        %v358 = vld [vmem:[#allocation2] sm:$0x1]
        %v359 = vmax.f32 %v358, %v357
        %v360 = vsub.f32 %v358, %v359
        %v361 = vmul.f32 %v360, 1.442695
        %v362 = vpow.pop %v361
        %v363 = vrot.slane %v337, 4
        %v364 = vmax.f32 %v337, %v363
        %v365 = vrot.slane %v364, 2
        %v366 = vmax.f32 %v364, %v365
        %v367 = vrot.slane %v366, 1
        %v368 = vmax.f32 %v366, %v367
        %s369 = vtos %v368
        %v370 = vstv %s369
        %v371 = vsub.f32 %v337, %v370
        %v372 = vmul.f32 %v371, 1.442695
        %v373 = vpow.pop %v372
        %v374 = vmul.f32 %v340, %v373
        %v375 = vrot.slane %v374, 4
        %v376 = vadd.f32 %v374, %v375
        %v377 = vrot.slane %v376, 2
        %v378 = vadd.f32 %v376, %v377
        %v379 = vrot.slane %v378, 1
        %v380 = vadd.f32 %v378, %v379
        %v381 = vld [vmem:[#allocation3] sm:$0x1]
        %v382 = vmul.f32 %v381, %v362
        %v383 = vsub.f32 %v370, %v359
        %v384 = vmul.f32 %v383, 1.442695
        %v385 = vpow.pop %v384
        %v386 = vmul.f32 %v380, %v385
        %v387 = vadd.f32 %v382, %v386
        %388 = vst [vmem:[#allocation3] sm:$0x1] %v387
        %389 = vst [vmem:[#allocation2] sm:$0x1] %v359
        // Predicated region
        $region45: #{tpu_custom_call.1} parent=31 // pred_check
          %p390 = pneg %p225
        $region46: #{tpu_custom_call.1} parent=31 // pred_check_branch
          %392 = sbr.rel (%p390) target = $region48
        $region47: #{tpu_custom_call.1} parent=31 // pred_region
          %v393 = vld [vmem:[#allocation2] sm:$0x1]
          %v394 = vld [vmem:[#allocation3] sm:$0x1]
          %v395 = vlog2.pop %v394
          %v396 = vmul.f32 %v395, 0.6931472
          %v397 = vadd.f32 %v393, %v396
          %v398 = vsel %vm332, %v397, 0.0
          %v399 = vld [vmem:[#allocation4] sm:$0xff]
          %v400 = vsel %vm350, %v399, 0.0
          %401 = vadd.xlane.f32.xlu0 %v400
          %v402 = vpop.xlane.xlu0 %401
          %v403 = vrot.slane %v402, 4
          %v404 = vadd.f32 %v402, %v403
          %v405 = vrot.slane %v404, 2
          %v406 = vadd.f32 %v404, %v405
          %v407 = vrot.slane %v406, 1
          %v408 = vadd.f32 %v406, %v407
          %s409 = vtos %v408
          %vm410 = vcmask 1040384
          %v411 = vsel %vm410, %v398, 0.0
          %412 = vadd.xlane.f32.xlu0 %v411
          %v413 = vpop.xlane.xlu0 %412
          %v414 = vrot.slane %v413, 4
          %v415 = vadd.f32 %v413, %v414
          %v416 = vrot.slane %v415, 2
          %v417 = vadd.f32 %v415, %v416
          %v418 = vrot.slane %v417, 1
          %v419 = vadd.f32 %v417, %v418
          %s420 = vtos %v419
          %s421 = sadd.f32 %s409, %s420
          %s422 = smul.f32 %s421, 0.0625
          %v423 = vstv %s422
          %v424 = vadd.f32 %v423, 0.0
          %425 = vst [vmem:[%s224] sm:$0xff] %v424
        $region48: #{tpu_custom_call.1} parent=31 // pred_fallthru
          _
        %s426 = sand.u32 %s117, 1
        %s427 = scalar_lea.sflag [#allocation8], %s426
        %s428 = sand.u32 %s117, 1
        %s429 = smul.addr %s428, 8
        %s430 = scalar_lea.vmem [#allocation11], %s429
        // Predicated region
        $region49: #{tpu_custom_call.1} parent=31 // pred_check
          %p431 = pneg %p127
        $region50: #{tpu_custom_call.1} parent=31 // pred_check_branch
          %433 = sbr.rel (%p431) target = $region52
        $region51: #{tpu_custom_call.1} parent=31 // pred_region
          %s435 = ssub.s32 128, 128
          %436 = vsyncadd %s427, %s435
          %s437 = smul.addr %s26, 128
          %s438 = scalar_lea.hbm %s3, %s437
          %s440 = sshll.u32 %s430, 4
          %s441 = int_to_ptr.vmem [resolvable:$true] %s440
          %443 = dma.vmem_to_hbm [thread:$0]  %s441, 128, %s438, %s427
        $region52: #{tpu_custom_call.1} parent=31 // pred_fallthru
          _
      $region32: #{tpu_custom_call.1} parent=5 // pred_fallthru
        _
      %p444 = scmp.le.s32.totalorder 2, %s17
      // Predicated region
      $region53: #{tpu_custom_call.1} parent=5 // pred_check
        %p445 = pneg %p444
      $region54: #{tpu_custom_call.1} parent=5 // pred_check_branch
        %447 = sbr.rel (%p445) target = $region56
      $region55: #{tpu_custom_call.1} parent=5 // pred_region
        %s448 = ssub.s32 %s17, 2
        // Predicated region
        $region57: #{tpu_custom_call.1} parent=55 // pred_check
          %p449 = pneg %p133
        $region58: #{tpu_custom_call.1} parent=55 // pred_check_branch
          %451 = sbr.rel (%p449) target = $region60
        $region59: #{tpu_custom_call.1} parent=55 // pred_region
          %s452 = sand.u32 %s118, 1
          %s453 = scalar_lea.sflag [#allocation8], %s452
          %s454 = sand.u32 %s118, 1
          %s455 = smul.addr %s454, 8
          %s456 = scalar_lea.vmem [#allocation11], %s455
          %457 = dma.done %s453, 128
        $region60: #{tpu_custom_call.1} parent=55 // pred_fallthru
          _
      $region56: #{tpu_custom_call.1} parent=5 // pred_fallthru
        _
    $region6: #{tpu_custom_call.1} parent=1 // loop_footer
      %s21 = sadd.s32 1, %s17
    $region7: #{tpu_custom_call.1} parent=1 // loop_footer_branch
      %16 = sbr.rel target = $region3
    $region8: #{tpu_custom_call.1} parent=1 // loop_exit
      _
    %458 = vsyncpa [#allocation7], 1
    %s459 = scalar_lea.sflag [#allocation7], 1
    %460 = vsyncpa %s459, 1
    %461 = vsyncpa [#allocation10], 1
    %462 = vsyncpa [#allocation8], 1
    %s463 = scalar_lea.sflag [#allocation8], 1
    %464 = vsyncpa %s463, 1

</llo_original>
